<compile_context>
chip_gen: v5e
topology: v5e:2x2
jax: 0.10.0
libtpu: 0.0.40
codegen_flags: <defaults>
</compile_context>

<pallas_src>
import functools

import jax
import jax.numpy as jnp
import numpy as np
from jax import lax
from jax.experimental import pallas as pl
from jax.experimental.pallas import tpu as pltpu


# --------------- fused QKV projection (row-tiled, lane-dense slabs) ---------------
def _qkv_kernel(x_ref, wqk_ref, wv_ref, qk_ref, v_ref):
    x = x_ref[...]
    qk_ref[...] = jnp.dot(x, wqk_ref[...], preferred_element_type=jnp.float32)
    v_ref[...] = jnp.dot(x, wv_ref[...], preferred_element_type=jnp.float32)


def qkv_project(x2d, w_qk, w_v, *, tm_target=2048):
    M, C = x2d.shape
    D2 = w_qk.shape[1]
    D = w_v.shape[1]
    tm = M if M <= tm_target else tm_target
    return pl.pallas_call(
        _qkv_kernel,
        out_shape=(jax.ShapeDtypeStruct((M, D2), jnp.float32),
                   jax.ShapeDtypeStruct((M, D), jnp.float32)),
        grid=(pl.cdiv(M, tm),),
        in_specs=[pl.BlockSpec((tm, C), lambda i: (i, 0)),
                  pl.BlockSpec((C, D2), lambda i: (0, 0)),
                  pl.BlockSpec((C, D), lambda i: (0, 0))],
        out_specs=(pl.BlockSpec((tm, D2), lambda i: (i, 0)),
                   pl.BlockSpec((tm, D), lambda i: (i, 0))),
        compiler_params=pltpu.CompilerParams(dimension_semantics=("parallel",)),
    )(x2d, w_qk, w_v)


# -------- attention statistics -> effective projection weights W_eff [B, D, C] -----
def _attn_weff_kernel(rescale_ref, qk_ref, wp_ref, weff_ref,
                      s_acc, qss, kss, *, heads, dh):
    D = heads * dh
    nt = pl.program_id(1)

    @pl.when(nt == 0)
    def _init():
        s_acc[...] = jnp.zeros_like(s_acc)
        qss[...] = jnp.zeros_like(qss)
        kss[...] = jnp.zeros_like(kss)

    slab = qk_ref[0]                        # [tn, 2D] fused q|k slab
    q = slab[:, :D]
    k = slab[:, D:]
    # attn numerator: S[i, j] += sum_n k[n, i] * q[n, j]  (one [D,D] MXU pass)
    s_acc[...] += lax.dot_general(k, q, (((0,), (0,)), ((), ())),
                                  preferred_element_type=jnp.float32)
    qss[...] += jnp.sum(q * q, axis=0, keepdims=True)
    kss[...] += jnp.sum(k * k, axis=0, keepdims=True)

    @pl.when(nt == pl.num_programs(1) - 1)
    def _finalize():
        eps2 = jnp.float32(1e-24)           # (F.normalize eps=1e-12)^2
        inv_q = lax.rsqrt(jnp.maximum(qss[...], eps2))      # [1, D]
        inv_k = lax.rsqrt(jnp.maximum(kss[...], eps2))      # [1, D]
        # diag(1/||k_i||) . S . diag(1/||q_j||)  == normalizing q/k first.
        s = s_acc[...] * inv_q * jnp.transpose(inv_k)
        wp = wp_ref[...]                    # [D, C]
        for h in range(heads):              # short unrolled loop on [dh, dh] blocks
            lo = h * dh
            blk = s[lo:lo + dh, lo:lo + dh] * rescale_ref[h]
            blk = blk - jnp.max(blk, axis=-1, keepdims=True)
            p = jnp.exp(blk)
            p = p / jnp.sum(p, axis=-1, keepdims=True)      # exact divide (fixes drift)
            # W_eff rows for this head: P^T @ Wproj[h block]
            weff_ref[0, lo:lo + dh, :] = lax.dot_general(
                p, wp[lo:lo + dh, :], (((0,), (0,)), ((), ())),
                preferred_element_type=jnp.float32)


def attn_weff(qk, rescale, wproj, *, heads, dh, tn_target=1024):
    B, N, D2 = qk.shape
    D = heads * dh
    assert D2 == 2 * D
    C = wproj.shape[1]
    tn = N if N <= tn_target else tn_target
    assert N % tn == 0 and (tn == N or tn % 8 == 0), \
        "sequence length must be divisible by the N tile"
    kern = functools.partial(_attn_weff_kernel, heads=heads, dh=dh)
    return pl.pallas_call(
        kern,
        out_shape=jax.ShapeDtypeStruct((B, D, C), jnp.float32),
        grid=(B, N // tn),
        in_specs=[pl.BlockSpec(memory_space=pltpu.MemorySpace.SMEM),
                  pl.BlockSpec((1, tn, D2), lambda b, t: (b, t, 0)),
                  pl.BlockSpec((D, C), lambda b, t: (0, 0))],
        out_specs=pl.BlockSpec((1, D, C), lambda b, t: (b, 0, 0)),
        scratch_shapes=[pltpu.VMEM((D, D), jnp.float32),
                        pltpu.VMEM((1, D), jnp.float32),
                        pltpu.VMEM((1, D), jnp.float32)],
        compiler_params=pltpu.CompilerParams(
            dimension_semantics=("parallel", "arbitrary")),
    )(rescale, qk, wproj)


# ---- fused final kernel: out = V @ W_eff + b  +  dwconv3x3 -> GELU -> dwconv3x3(V) ----
def _proj_posemb_kernel(v_ref, v_hbm, weff_ref, bp_ref, w1_ref, w2_ref, o_ref,
                        padv, padh, halo, sem, *, th, H, W, C):
    b = pl.program_id(0)
    r = pl.program_id(1)
    has_top = r > 0
    has_bot = r < pl.num_programs(1) - 1

    # 2-row halos above/below the strip (two stacked 3x3 convs).  Source rows
    # are clamped so the DMA is always in range; at image borders the halo is
    # replaced by zeros after the wait.
    top_src = jnp.maximum(r * th - 2, 0)
    bot_src = jnp.minimum((r + 1) * th, H - 2)
    cp_top = pltpu.make_async_copy(v_hbm.at[b, pl.ds(top_src, 2)],
                                   halo.at[pl.ds(0, 2)], sem.at[0])
    cp_bot = pltpu.make_async_copy(v_hbm.at[b, pl.ds(bot_src, 2)],
                                   halo.at[pl.ds(2, 2)], sem.at[1])
    cp_top.start()
    cp_bot.start()

    v_strip = v_ref[0]                                    # [th, W, C]

    # Attention output for this strip: the per-head softmax is already folded
    # into W_eff, so out_c = V @ W_eff + bias is one big MXU matmul.
    out_c = jnp.dot(v_strip.reshape(th * W, C), weff_ref[0],
                    preferred_element_type=jnp.float32).reshape(th, W, C)
    out_c = out_c + bp_ref[...][None]

    # Padded v buffer.  Only the thin borders are re-zeroed each step (cheap),
    # so nothing depends on scratch contents left by other grid steps/cores.
    zcol = jnp.zeros((th + 4, 1, C), jnp.float32)
    padv[:, 0:1, :] = zcol
    padv[:, W + 1:W + 2, :] = zcol
    padv[2:th + 2, 1:W + 1, :] = v_strip

    cp_top.wait()
    cp_bot.wait()
    padv[0:2, 1:W + 1, :] = jnp.where(has_top, halo[0:2], 0.0)
    padv[th + 2:th + 4, 1:W + 1, :] = jnp.where(has_bot, halo[2:4], 0.0)

    # Depthwise conv1 over strip rows [-1, th+1) (the extra row each side
    # supplies conv2's 1-row halo of h1), then exact-erf GELU (== F.gelu).
    # NOTE: the dx=0/2 taps are sublane-misaligned slices; pltpu.roll along W
    # with border masks would move that work to the idle XLU slot.
    w1 = w1_ref[...]
    acc1 = jnp.zeros((th + 2, W, C), jnp.float32)
    for dy in range(3):
        for dx in range(3):
            acc1 = acc1 + padv[dy:dy + th + 2, dx:dx + W, :] * w1[dy, dx, :]
    h1 = jax.nn.gelu(acc1, approximate=False)

    # h1 rows that fall outside the image are zero padding for conv2.
    row = lax.broadcasted_iota(jnp.int32, (th + 2, 1, 1), 0)
    keep = jnp.logical_and(jnp.logical_or(row != 0, has_top),
                           jnp.logical_or(row != th + 1, has_bot))
    h1 = jnp.where(keep, h1, 0.0)

    zcol2 = jnp.zeros((th + 2, 1, C), jnp.float32)
    padh[:, 0:1, :] = zcol2
    padh[:, W + 1:W + 2, :] = zcol2
    padh[:, 1:W + 1, :] = h1

    # Depthwise conv2, fused with the attention-output add.
    w2 = w2_ref[...]
    acc2 = jnp.zeros((th, W, C), jnp.float32)
    for dy in range(3):
        for dx in range(3):
            acc2 = acc2 + padh[dy:dy + th, dx:dx + W, :] * w2[dy, dx, :]

    o_ref[0] = out_c + acc2


def proj_posemb(v_img, weff, bproj, w1, w2, *, th_target=64):
    B, H, W, C = v_img.shape
    assert H >= 2, "image height must be >= 2"
    D = weff.shape[1]
    # Largest divisor of H in [2, th_target]; otherwise a single whole strip.
    th = H
    for cand in range(2, min(H, th_target) + 1):
        if H % cand == 0:
            th = cand
    kern = functools.partial(_proj_posemb_kernel, th=th, H=H, W=W, C=C)
    strip = pl.BlockSpec((1, th, W, C), lambda b, r: (b, r, 0, 0))
    return pl.pallas_call(
        kern,
        out_shape=jax.ShapeDtypeStruct((B, H, W, C), jnp.float32),
        grid=(B, H // th),
        in_specs=[strip,
                  pl.BlockSpec(memory_space=pl.ANY),      # raw HBM v for halo DMAs
                  pl.BlockSpec((1, D, C), lambda b, r: (b, 0, 0)),
                  pl.BlockSpec((1, C), lambda b, r: (0, 0)),
                  pl.BlockSpec((3, 3, C), lambda b, r: (0, 0, 0)),
                  pl.BlockSpec((3, 3, C), lambda b, r: (0, 0, 0))],
        out_specs=pl.BlockSpec((1, th, W, C), lambda b, r: (b, r, 0, 0)),
        scratch_shapes=[pltpu.VMEM((th + 4, W + 2, C), jnp.float32),
                        pltpu.VMEM((th + 2, W + 2, C), jnp.float32),
                        pltpu.VMEM((4, W, C), jnp.float32),
                        pltpu.SemaphoreType.DMA((2,))],
        compiler_params=pltpu.CompilerParams(
            dimension_semantics=("parallel", "parallel")),
    )(v_img, v_img, weff, bproj, w1, w2)


# ---------------- MS_MSA forward (Pallas kernels, no host relayouts) ----------------
def ms_msa_forward(x_in, p, *, tm_target=2048, tn_target=1024, th_target=64):
    B, H, W, C = x_in.shape
    heads, dh = p["heads"], p["dim_head"]
    D = heads * dh
    assert D == C, "MS_MSA pos_emb branch requires heads * dim_head == dim"
    N = H * W
    x2d = x_in.reshape(B * N, C).astype(jnp.float32)

    # Fused lane-dense q|k slab + separate v (the conv/proj kernel only reads v).
    w_qk = jnp.concatenate([p["wq"], p["wk"]], axis=1)          # [C, 2D]
    qk2d, v2d = qkv_project(x2d, w_qk, p["wv"], tm_target=tm_target)

    # Per-batch effective projection weights W_eff = blockdiag(P^T) @ Wproj.
    weff = attn_weff(qk2d.reshape(B, N, 2 * D), p["rescale"], p["wproj"],
                     heads=heads, dh=dh, tn_target=tn_target)   # [B, D, C]

    # out = V @ W_eff + bias + pos_emb(V), one fused row-strip kernel.
    v_img = v2d.reshape(B, H, W, D)
    return proj_posemb(v_img, weff, p["bproj"], p["pos_w1"], p["pos_w2"],
                       th_target=th_target)


# ---------------- Pure-JAX reference for validation ----------------
def ms_msa_reference(x_in, p):
    B, H, W, C = x_in.shape
    heads, dh = p["heads"], p["dim_head"]
    N = H * W
    x = x_in.reshape(B, N, C)
    q_inp = x @ p["wq"]
    k_inp = x @ p["wk"]
    v_inp = x @ p["wv"]

    def to_heads(t):
        return jnp.transpose(t.reshape(B, N, heads, dh), (0, 2, 3, 1))

    q, k, v = to_heads(q_inp), to_heads(k_inp), to_heads(v_inp)

    def l2norm(t):
        n = jnp.sqrt(jnp.sum(t * t, axis=-1, keepdims=True))
        return t / jnp.maximum(n, 1e-12)

    q, k = l2norm(q), l2norm(k)
    attn = jnp.einsum("bhin,bhjn->bhij", k, q)
    attn = attn * p["rescale"][None, :, None, None]
    attn = jax.nn.softmax(attn, axis=-1)
    xo = jnp.einsum("bhij,bhjn->bhin", attn, v)
    xo = jnp.transpose(xo, (0, 3, 1, 2)).reshape(B, N, heads * dh)
    out_c = (xo @ p["wproj"] + p["bproj"]).reshape(B, H, W, C)

    def dwconv(t, wgt):
        tp = jnp.pad(t, ((0, 0), (1, 1), (1, 1), (0, 0)))
        acc = jnp.zeros_like(t)
        for dy in range(3):
            for dx in range(3):
                acc = acc + tp[:, dy:dy + H, dx:dx + W, :] * wgt[dy, dx, :]
        return acc

    v_img = v_inp.reshape(B, H, W, C)
    h1 = jax.nn.gelu(dwconv(v_img, p["pos_w1"]), approximate=False)
    out_p = dwconv(h1, p["pos_w2"])
    return out_c + out_p


if __name__ == "__main__":
    B, H, W = 2, 8, 8
    dim, heads, dim_head = 32, 4, 8          # dim == heads * dim_head (required)

    key = jax.random.PRNGKey(0)
    ks = jax.random.split(key, 9)
    x_in = jax.random.normal(ks[0], (B, H, W, dim), jnp.float32)

    params = dict(
        heads=heads,
        dim_head=dim_head,
        wq=0.1 * jax.random.normal(ks[1], (dim, heads * dim_head), jnp.float32),
        wk=0.1 * jax.random.normal(ks[2], (dim, heads * dim_head), jnp.float32),
        wv=0.1 * jax.random.normal(ks[3], (dim, heads * dim_head), jnp.float32),
        # nn.Parameter(torch.ones(heads,1,1)) -> perturbed to exercise the scale path
        rescale=jnp.ones((heads,), jnp.float32)
        + 0.05 * jax.random.normal(ks[4], (heads,), jnp.float32),
        wproj=0.1 * jax.random.normal(ks[5], (heads * dim_head, dim), jnp.float32),
        bproj=0.01 * jax.random.normal(ks[6], (1, dim), jnp.float32),
        pos_w1=0.1 * jax.random.normal(ks[7], (3, 3, dim), jnp.float32),
        pos_w2=0.1 * jax.random.normal(ks[8], (3, 3, dim), jnp.float32),
    )

    # Small tile targets so the tiny test exercises every tiled/pipelined path
    # (multi-tile QKV rows, a 2-step N reduction in the attention stats kernel,
    # and 2 row strips with real halo DMAs in the conv/projection kernel).
    out = ms_msa_forward(x_in, params, tm_target=64, tn_target=32, th_target=4)
    out = jax.block_until_ready(out)

    ref = ms_msa_reference(x_in, params)
    np.testing.assert_allclose(np.asarray(out), np.asarray(ref),
                               rtol=2e-3, atol=5e-4)
    print("KERNEL_OK")
</pallas_src>

<mosaic_0001>
module attributes {stable_mosaic.version = 11 : i64} {
  func.func @_qkv_kernel(%arg0: i32, %arg1: memref<64x32xf32, #tpu.memory_space<vmem>>, %arg2: memref<32x64xf32, #tpu.memory_space<vmem>>, %arg3: memref<32x32xf32, #tpu.memory_space<vmem>>, %arg4: memref<64x64xf32, #tpu.memory_space<vmem>>, %arg5: memref<64x32xf32, #tpu.memory_space<vmem>>) attributes {dimension_semantics = [#tpu.dimension_semantics<parallel>], iteration_bounds = array<i64: 2>, scalar_prefetch = 0 : i64, scratch_operands = 0 : i64, tpu.core_type = #tpu.core_type<tc>, window_params = [{transform_indices = @transform_0, window_bounds = array<i64: 64, 32>}, {pipeline_mode = #tpu.pipeline_mode<synchronous>, transform_indices = @transform_1, window_bounds = array<i64: 32, 64>}, {pipeline_mode = #tpu.pipeline_mode<synchronous>, transform_indices = @transform_2, window_bounds = array<i64: 32, 32>}, {transform_indices = @transform_3, window_bounds = array<i64: 64, 64>}, {transform_indices = @transform_4, window_bounds = array<i64: 64, 32>}]} {
    %c0 = arith.constant 0 : index
    %c0_0 = arith.constant 0 : index
    %0 = vector.load %arg1[%c0, %c0_0] : memref<64x32xf32, #tpu.memory_space<vmem>>, vector<64x32xf32>
    %c0_1 = arith.constant 0 : index
    %c0_2 = arith.constant 0 : index
    %1 = vector.load %arg2[%c0_1, %c0_2] : memref<32x64xf32, #tpu.memory_space<vmem>>, vector<32x64xf32>
    %cst = arith.constant dense<0.000000e+00> : vector<64x64xf32>
    %2 = tpu.matmul %0, %1, %cst {dimension_numbers = #tpu.dot_dimension_numbers<[1], [0], [0], [1], [0, 0, 1, 1], [], []>} : vector<64x32xf32>, vector<32x64xf32>, vector<64x64xf32> -> vector<64x64xf32>
    %c0_3 = arith.constant 0 : index
    %c0_4 = arith.constant 0 : index
    %3 = vector.load %arg4[%c0_3, %c0_4] : memref<64x64xf32, #tpu.memory_space<vmem>>, vector<64x64xf32>
    tpu.vector_store %arg4[%c0_3, %c0_4], %2 {strides = array<i32>} : memref<64x64xf32, #tpu.memory_space<vmem>>, vector<64x64xf32>,
    %c0_5 = arith.constant 0 : index
    %c0_6 = arith.constant 0 : index
    %4 = vector.load %arg3[%c0_5, %c0_6] : memref<32x32xf32, #tpu.memory_space<vmem>>, vector<32x32xf32>
    %cst_7 = arith.constant dense<0.000000e+00> : vector<64x32xf32>
    %5 = tpu.matmul %0, %4, %cst_7 {dimension_numbers = #tpu.dot_dimension_numbers<[1], [0], [0], [1], [0, 0, 1, 1], [], []>} : vector<64x32xf32>, vector<32x32xf32>, vector<64x32xf32> -> vector<64x32xf32>
    %c0_8 = arith.constant 0 : index
    %c0_9 = arith.constant 0 : index
    %6 = vector.load %arg5[%c0_8, %c0_9] : memref<64x32xf32, #tpu.memory_space<vmem>>, vector<64x32xf32>
    tpu.vector_store %arg5[%c0_8, %c0_9], %5 {strides = array<i32>} : memref<64x32xf32, #tpu.memory_space<vmem>>, vector<64x32xf32>,
    return
  }
  func.func @transform_0(%arg0: i32) -> (i32, i32) {
    %c0_i32 = arith.constant 0 : i32
    %c0_i32_0 = arith.constant 0 : i32
    return %arg0, %c0_i32 : i32, i32
  }
  func.func @transform_1(%arg0: i32) -> (i32, i32) {
    %c0_i32 = arith.constant 0 : i32
    %c0_i32_0 = arith.constant 0 : i32
    %c0_i32_1 = arith.constant 0 : i32
    return %c0_i32, %c0_i32_0 : i32, i32
  }
  func.func @transform_2(%arg0: i32) -> (i32, i32) {
    %c0_i32 = arith.constant 0 : i32
    %c0_i32_0 = arith.constant 0 : i32
    %c0_i32_1 = arith.constant 0 : i32
    return %c0_i32, %c0_i32_0 : i32, i32
  }
  func.func @transform_3(%arg0: i32) -> (i32, i32) {
    %c0_i32 = arith.constant 0 : i32
    %c0_i32_0 = arith.constant 0 : i32
    return %arg0, %c0_i32 : i32, i32
  }
  func.func @transform_4(%arg0: i32) -> (i32, i32) {
    %c0_i32 = arith.constant 0 : i32
    %c0_i32_0 = arith.constant 0 : i32
    return %arg0, %c0_i32 : i32, i32
  }
}

</mosaic_0001>

<llo_original>
// kernel: tpu_custom_call.1
$region0: #{tpu_custom_call.1}
  #allocation0 [shape = 'u32[]', space=smem, size = 0x4, offset = 0x4, fixed_abs, tag = 'smem constant byte address 0x4 - core index']
  #allocation1 [shape = 'u32[72,128]{1,0:T(1,128)}', space=vmem, size = 0x9000, scoped, tag = 'internal scratch']
  %s0 = inlined_call_operand.vmem [shape: f32[128,32], index: 0, kind: input, shape index: {}]
  %s1 = inlined_call_operand.vmem [shape: f32[32,64], index: 1, kind: input, shape index: {}]
  %s2 = inlined_call_operand.vmem [shape: f32[32,32], index: 2, kind: input, shape index: {}]
  %s3 = inlined_call_operand.vmem [shape: f32[128,64], index: 3, kind: output, shape index: {0}]
  %s4 = inlined_call_operand.vmem [shape: f32[128,32], index: 4, kind: output, shape index: {1}]
  %5 = xla_tuple %s3, %s4
  %s6 = sld [smem:[#allocation0]]
  $region53: #{tpu_custom_call.1} parent=0
    _
  %s8 = ssub.s32 1, %s6
  %s9 = scalar_select 0, %s8, %s6
  loop: start=0, step=1, limit=4
  $region2: #{tpu_custom_call.1} parent=0 // loop_pre_header
    _
  $region3: #{tpu_custom_call.1} parent=0 // loop_header
    %s11 = sphi 0, %s15
    %p12 = scmp.ge.s32.totalorder %s11, 4
    %s21 = sphi 0, %s23
    %s24 = sphi 0, %s21
    %s25 = sphi 0, %s24
    %s41 = sphi 0, %s25
    %s45 = sphi 0, %s45
    %s47 = sphi 0, %s45
    %s48 = sphi 0, %s47
    %s62 = sphi 0, %s48
    %s66 = sphi 0, %s66
    %s68 = sphi 0, %s66
    %s69 = sphi 0, %s68
    %s83 = sphi 0, %s69
    %s89 = sphi 0, %s91
    %s92 = sphi 0, %s89
    %s93 = sphi 0, %s92
    %s109 = sphi 0, %s93
    %s115 = sphi 0, %s117
    %s118 = sphi 0, %s115
    %s119 = sphi 0, %s118
    %s135 = sphi 0, %s119
  $region4: #{tpu_custom_call.1} parent=0 // loop_header_branch
    %14 = sbr.rel (%p12) target = $region8
  $region5: #{tpu_custom_call.1} parent=0 // loop_body
    %s16 = ssub.s32 %s11, 1
    %s17 = ssub.s32 %s11, 2
    %s18 = sadd.s32 %s11, 1
    %s19 = ssub.s32 %s11, %s18
    %p20 = scmp.eq.s32.totalorder %s19, 0
    %s22 = sadd.s32 %s21, 1
    %s23 = scalar_select %p20, %s21, %s22
    %p26 = pneg %p20
    %p27 = scmp.eq.s32.totalorder %s11, 1
    %p28 = por %p26, %p27
    %p29 = scmp.ne.s32.totalorder %s21, %s24
    %p30 = scmp.eq.s32.totalorder %s11, 0
    %p31 = por %p29, %p30
    %p32 = scmp.ne.s32.totalorder %s21, %s24
    %p33 = scmp.eq.s32.totalorder %s16, 1
    %p34 = por %p32, %p33
    %p35 = scmp.ne.s32.totalorder %s24, %s25
    %p36 = scmp.eq.s32.totalorder %s16, 0
    %p37 = por %p35, %p36
    %p38 = scmp.ne.s32.totalorder %s24, %s25
    %p39 = scmp.eq.s32.totalorder %s17, 1
    %p40 = por %p38, %p39
    %p42 = scmp.ne.s32.totalorder %s25, %s41
    %p43 = scmp.eq.s32.totalorder %s17, 0
    %p44 = por %p42, %p43
    %s46 = sadd.s32 %s45, 1
    %p49 = scmp.eq.s32.totalorder %s11, 1
    %p50 = scmp.ne.s32.totalorder %s45, %s47
    %p51 = scmp.eq.s32.totalorder %s11, 0
    %p52 = por %p50, %p51
    %p53 = scmp.ne.s32.totalorder %s45, %s47
    %p54 = scmp.eq.s32.totalorder %s16, 1
    %p55 = por %p53, %p54
    %p56 = scmp.ne.s32.totalorder %s47, %s48
    %p57 = scmp.eq.s32.totalorder %s16, 0
    %p58 = por %p56, %p57
    %p59 = scmp.ne.s32.totalorder %s47, %s48
    %p60 = scmp.eq.s32.totalorder %s17, 1
    %p61 = por %p59, %p60
    %p63 = scmp.ne.s32.totalorder %s48, %s62
    %p64 = scmp.eq.s32.totalorder %s17, 0
    %p65 = por %p63, %p64
    %s67 = sadd.s32 %s66, 1
    %p70 = scmp.eq.s32.totalorder %s11, 1
    %p71 = scmp.ne.s32.totalorder %s66, %s68
    %p72 = scmp.eq.s32.totalorder %s11, 0
    %p73 = por %p71, %p72
    %p74 = scmp.ne.s32.totalorder %s66, %s68
    %p75 = scmp.eq.s32.totalorder %s16, 1
    %p76 = por %p74, %p75
    %p77 = scmp.ne.s32.totalorder %s68, %s69
    %p78 = scmp.eq.s32.totalorder %s16, 0
    %p79 = por %p77, %p78
    %p80 = scmp.ne.s32.totalorder %s68, %s69
    %p81 = scmp.eq.s32.totalorder %s17, 1
    %p82 = por %p80, %p81
    %p84 = scmp.ne.s32.totalorder %s69, %s83
    %p85 = scmp.eq.s32.totalorder %s17, 0
    %p86 = por %p84, %p85
    %s87 = ssub.s32 %s11, %s18
    %p88 = scmp.eq.s32.totalorder %s87, 0
    %s90 = sadd.s32 %s89, 1
    %s91 = scalar_select %p88, %s89, %s90
    %p94 = pneg %p88
    %p95 = scmp.eq.s32.totalorder %s11, 1
    %p96 = por %p94, %p95
    %p97 = scmp.ne.s32.totalorder %s89, %s92
    %p98 = scmp.eq.s32.totalorder %s11, 0
    %p99 = por %p97, %p98
    %p100 = scmp.ne.s32.totalorder %s89, %s92
    %p101 = scmp.eq.s32.totalorder %s16, 1
    %p102 = por %p100, %p101
    %p103 = scmp.ne.s32.totalorder %s92, %s93
    %p104 = scmp.eq.s32.totalorder %s16, 0
    %p105 = por %p103, %p104
    %p106 = scmp.ne.s32.totalorder %s92, %s93
    %p107 = scmp.eq.s32.totalorder %s17, 1
    %p108 = por %p106, %p107
    %p110 = scmp.ne.s32.totalorder %s93, %s109
    %p111 = scmp.eq.s32.totalorder %s17, 0
    %p112 = por %p110, %p111
    %s113 = ssub.s32 %s11, %s18
    %p114 = scmp.eq.s32.totalorder %s113, 0
    %s116 = sadd.s32 %s115, 1
    %s117 = scalar_select %p114, %s115, %s116
    %p120 = pneg %p114
    %p121 = scmp.eq.s32.totalorder %s11, 1
    %p122 = por %p120, %p121
    %p123 = scmp.ne.s32.totalorder %s115, %s118
    %p124 = scmp.eq.s32.totalorder %s11, 0
    %p125 = por %p123, %p124
    %p126 = scmp.ne.s32.totalorder %s115, %s118
    %p127 = scmp.eq.s32.totalorder %s16, 1
    %p128 = por %p126, %p127
    %p129 = scmp.ne.s32.totalorder %s118, %s119
    %p130 = scmp.eq.s32.totalorder %s16, 0
    %p131 = por %p129, %p130
    %p132 = scmp.ne.s32.totalorder %s118, %s119
    %p133 = scmp.eq.s32.totalorder %s17, 1
    %p134 = por %p132, %p133
    %p136 = scmp.ne.s32.totalorder %s119, %s135
    %p137 = scmp.eq.s32.totalorder %s17, 0
    %p138 = por %p136, %p137
    %p139 = scmp.le.s32.totalorder 1, %s11
    %p140 = scmp.lt.s32.totalorder %s11, 3
    %p141 = pnand %p139, %p140
    %p142 = pneg %p141
    // Predicated region
    $region9: #{tpu_custom_call.1} parent=5 // pred_check
      _
    $region10: #{tpu_custom_call.1} parent=5 // pred_check_branch
      %144 = sbr.rel (%p141) target = $region12
    $region11: #{tpu_custom_call.1} parent=5 // pred_region
      %s145 = ssub.s32 %s11, 1
      // Predicated region
      $region13: #{tpu_custom_call.1} parent=11 // pred_check
        %p146 = pneg %p58
      $region14: #{tpu_custom_call.1} parent=11 // pred_check_branch
        %148 = sbr.rel (%p146) target = $region16
      $region15: #{tpu_custom_call.1} parent=11 // pred_region
        _
      $region16: #{tpu_custom_call.1} parent=11 // pred_fallthru
        _
      // Predicated region
      $region17: #{tpu_custom_call.1} parent=11 // pred_check
        %p149 = pneg %p79
      $region18: #{tpu_custom_call.1} parent=11 // pred_check_branch
        %151 = sbr.rel (%p149) target = $region20
      $region19: #{tpu_custom_call.1} parent=11 // pred_region
        _
      $region20: #{tpu_custom_call.1} parent=11 // pred_fallthru
        _
    $region12: #{tpu_custom_call.1} parent=5 // pred_fallthru
      _
    %p152 = scmp.lt.s32.totalorder %s11, 2
    // Predicated region
    $region21: #{tpu_custom_call.1} parent=5 // pred_check
      %p153 = pneg %p152
    $region22: #{tpu_custom_call.1} parent=5 // pred_check_branch
      %155 = sbr.rel (%p153) target = $region24
    $region23: #{tpu_custom_call.1} parent=5 // pred_region
      // Predicated region
      $region25: #{tpu_custom_call.1} parent=23 // pred_check
        %p156 = pneg %p31
      $region26: #{tpu_custom_call.1} parent=23 // pred_check_branch
        %158 = sbr.rel (%p156) target = $region28
      $region27: #{tpu_custom_call.1} parent=23 // pred_region
        %s159 = smul.u32 8, %s11
        %p160 = scmp.lt.s32.totalorder %s159, 15
        %s161 = scalar_select %p160, %s159, 15
        %s162 = smul.addr %s161, 8
        %s163 = scalar_lea.vmem %s0, %s162
        %s164 = smul.u32 8, %s11
      $region28: #{tpu_custom_call.1} parent=23 // pred_fallthru
        _
    $region24: #{tpu_custom_call.1} parent=5 // pred_fallthru
      _
    %p165 = scmp.le.s32.totalorder 1, %s11
    %p166 = scmp.lt.s32.totalorder %s11, 3
    %p167 = pnand %p165, %p166
    %p168 = pneg %p167
    // Predicated region
    $region29: #{tpu_custom_call.1} parent=5 // pred_check
      _
    $region30: #{tpu_custom_call.1} parent=5 // pred_check_branch
      %170 = sbr.rel (%p167) target = $region32
    $region31: #{tpu_custom_call.1} parent=5 // pred_region
      %s171 = ssub.s32 %s11, 1
      %s172 = smul.u32 8, %s16
      %p173 = scmp.lt.s32.totalorder %s172, 15
      %s174 = scalar_select %p173, %s172, 15
      %s175 = smul.addr %s174, 8
      %s176 = scalar_lea.vmem %s0, %s175
      %p177 = pneg %p37
      %p178 = pneg %p34
      %p179 = pneg %p58
      %p180 = pneg %p55
      %p181 = pneg %p79
      %p182 = pneg %p76
      %p183 = pneg %p105
      %p184 = pneg %p102
      %s185 = smul.u32 8, %s16
      %p186 = scmp.lt.s32.totalorder %s185, 15
      %s187 = scalar_select %p186, %s185, 15
      %s188 = smul.addr %s187, 8
      %s189 = scalar_lea.vmem %s3, %s188
      %p190 = pneg %p131
      %p191 = pneg %p128
      %s192 = smul.u32 8, %s16
      %p193 = scmp.lt.s32.totalorder %s192, 15
      %s194 = scalar_select %p193, %s192, 15
      %s195 = smul.addr %s194, 8
      %s196 = scalar_lea.vmem %s4, %s195
      %s197 = smul.u32 8, %s16
      %p198 = scmp.lt.s32.totalorder %s197, 15
      %s199 = scalar_select %p198, %s197, 15
      %s200 = smul.addr %s199, 8
      %s201 = scalar_lea.vmem %s0, %s200
      %s202 = smul.u32 8, %s16
      %s203 = smul.u32 8, %s16
      %p204 = scmp.lt.s32.totalorder %s203, 15
      %s205 = scalar_select %p204, %s203, 15
      %s206 = smul.addr %s205, 8
      %s207 = scalar_lea.vmem %s3, %s206
      %s208 = smul.u32 8, %s16
      %s209 = smul.u32 8, %s16
      %p210 = scmp.lt.s32.totalorder %s209, 15
      %s211 = scalar_select %p210, %s209, 15
      %s212 = smul.addr %s211, 8
      %s213 = scalar_lea.vmem %s4, %s212
      %s214 = smul.u32 8, %s16
      %v215 = vld [vmem:[%s201] sm:$0xff]
      %v216 = vld [vmem:[%s201 + $0x8] sm:$0xff]
      %v217 = vld [vmem:[%s201 + $0x10] sm:$0xff]
      %v218 = vld [vmem:[%s201 + $0x18] sm:$0xff]
      %v219 = vld [vmem:[%s201 + $0x20] sm:$0xff]
      %v220 = vld [vmem:[%s201 + $0x28] sm:$0xff]
      %v221 = vld [vmem:[%s201 + $0x30] sm:$0xff]
      %v222 = vld [vmem:[%s201 + $0x38] sm:$0xff]
      %v223 = vld [vmem:[%s1] sm:$0xff]
      %v224 = vld [vmem:[%s1 + $0x8] sm:$0xff]
      %v225 = vld [vmem:[%s1 + $0x10] sm:$0xff]
      %v226 = vld [vmem:[%s1 + $0x18] sm:$0xff]
      %vm227 = vcmask 261120
      %v229 = vsel %vm227, %v215, 0
      %v232 = vsel %vm227, %v216, 0
      %v235 = vsel %vm227, %v217, 0
      %v238 = vsel %vm227, %v218, 0
      %v241 = vsel %vm227, %v219, 0
      %v244 = vsel %vm227, %v220, 0
      %v247 = vsel %vm227, %v221, 0
      %v250 = vsel %vm227, %v222, 0
      %252 = vmatpush.msra.mxu0 0.0
      %253 = vmatpush.msra.mxu0 0.0
      %254 = vmatpush.msra.mxu0 0.0
      %255 = vmatpush.msra.mxu0 0.0
      %256 = vmatpush.msra.mxu0 0.0
      %257 = vmatpush.msra.mxu0 0.0
      %258 = vmatpush.msra.mxu0 0.0
      %259 = vmatpush.msra.mxu0 0.0
      %260 = vmatpush.msra.mxu0 0.0
      %261 = vmatpush.msra.mxu0 0.0
      %262 = vmatpush.msra.mxu0 0.0
      %263 = vmatpush.msra.mxu0 0.0
      %264 = vmatpush.msra.mxu0 %v226
      %265 = vmatpush.msra.mxu0 %v225
      %266 = vmatpush.msra.mxu0 %v224
      %267 = vmatpush.msra.mxu0 %v223
      %268 = vmatmul.f32.gmra.mxu0 %v229
      %v269 = vpop.f32.mrf.mxu0
      %v270 = vadd.f32 0.0, %v269
      %271 = vmatmul.f32.gmra.mxu0 %v232
      %v272 = vpop.f32.mrf.mxu0
      %v273 = vadd.f32 0.0, %v272
      %274 = vmatmul.f32.gmra.mxu0 %v235
      %v275 = vpop.f32.mrf.mxu0
      %v276 = vadd.f32 0.0, %v275
      %277 = vmatmul.f32.gmra.mxu0 %v238
      %v278 = vpop.f32.mrf.mxu0
      %v279 = vadd.f32 0.0, %v278
      %280 = vmatmul.f32.gmra.mxu0 %v241
      %v281 = vpop.f32.mrf.mxu0
      %v282 = vadd.f32 0.0, %v281
      %283 = vmatmul.f32.gmra.mxu0 %v244
      %v284 = vpop.f32.mrf.mxu0
      %v285 = vadd.f32 0.0, %v284
      %286 = vmatmul.f32.gmra.mxu0 %v247
      %v287 = vpop.f32.mrf.mxu0
      %v288 = vadd.f32 0.0, %v287
      %289 = vmatmul.f32.gmra.mxu0 %v250
      %v290 = vpop.f32.mrf.mxu0
      %v291 = vadd.f32 0.0, %v290
      %292 = vdwg.mxu0
      %vm293 = vcmask 523264
      %294 = vst.msk [vmem:[%s207] sm:$0xff] %vm293, %v270
      %295 = vst.msk [vmem:[%s207 + $0x8] sm:$0xff] %vm293, %v273
      %296 = vst.msk [vmem:[%s207 + $0x10] sm:$0xff] %vm293, %v276
      %297 = vst.msk [vmem:[%s207 + $0x18] sm:$0xff] %vm293, %v279
      %298 = vst.msk [vmem:[%s207 + $0x20] sm:$0xff] %vm293, %v282
      %299 = vst.msk [vmem:[%s207 + $0x28] sm:$0xff] %vm293, %v285
      %300 = vst.msk [vmem:[%s207 + $0x30] sm:$0xff] %vm293, %v288
      %301 = vst.msk [vmem:[%s207 + $0x38] sm:$0xff] %vm293, %v291
      %v302 = vld [vmem:[%s2] sm:$0xff]
      %v303 = vld [vmem:[%s2 + $0x8] sm:$0xff]
      %v304 = vld [vmem:[%s2 + $0x10] sm:$0xff]
      %v305 = vld [vmem:[%s2 + $0x18] sm:$0xff]
      %306 = vmatpush.msra.mxu0 0.0
      %307 = vmatpush.msra.mxu0 0.0
      %308 = vmatpush.msra.mxu0 0.0
      %309 = vmatpush.msra.mxu0 0.0
      %310 = vmatpush.msra.mxu0 0.0
      %311 = vmatpush.msra.mxu0 0.0
      %312 = vmatpush.msra.mxu0 0.0
      %313 = vmatpush.msra.mxu0 0.0
      %314 = vmatpush.msra.mxu0 0.0
      %315 = vmatpush.msra.mxu0 0.0
      %316 = vmatpush.msra.mxu0 0.0
      %317 = vmatpush.msra.mxu0 0.0
      %318 = vmatpush.msra.mxu0 %v305
      %319 = vmatpush.msra.mxu0 %v304
      %320 = vmatpush.msra.mxu0 %v303
      %321 = vmatpush.msra.mxu0 %v302
      %322 = vmatmul.f32.gmra.mxu0 %v229
      %v323 = vpop.f32.mrf.mxu0
      %v324 = vadd.f32 0.0, %v323
      %325 = vmatmul.f32.gmra.mxu0 %v232
      %v326 = vpop.f32.mrf.mxu0
      %v327 = vadd.f32 0.0, %v326
      %328 = vmatmul.f32.gmra.mxu0 %v235
      %v329 = vpop.f32.mrf.mxu0
      %v330 = vadd.f32 0.0, %v329
      %331 = vmatmul.f32.gmra.mxu0 %v238
      %v332 = vpop.f32.mrf.mxu0
      %v333 = vadd.f32 0.0, %v332
      %334 = vmatmul.f32.gmra.mxu0 %v241
      %v335 = vpop.f32.mrf.mxu0
      %v336 = vadd.f32 0.0, %v335
      %337 = vmatmul.f32.gmra.mxu0 %v244
      %v338 = vpop.f32.mrf.mxu0
      %v339 = vadd.f32 0.0, %v338
      %340 = vmatmul.f32.gmra.mxu0 %v247
      %v341 = vpop.f32.mrf.mxu0
      %v342 = vadd.f32 0.0, %v341
      %343 = vmatmul.f32.gmra.mxu0 %v250
      %v344 = vpop.f32.mrf.mxu0
      %v345 = vadd.f32 0.0, %v344
      %346 = vdwg.mxu0
      %347 = vst.msk [vmem:[%s213] sm:$0xff] %vm227, %v324
      %348 = vst.msk [vmem:[%s213 + $0x8] sm:$0xff] %vm227, %v327
      %349 = vst.msk [vmem:[%s213 + $0x10] sm:$0xff] %vm227, %v330
      %350 = vst.msk [vmem:[%s213 + $0x18] sm:$0xff] %vm227, %v333
      %351 = vst.msk [vmem:[%s213 + $0x20] sm:$0xff] %vm227, %v336
      %352 = vst.msk [vmem:[%s213 + $0x28] sm:$0xff] %vm227, %v339
      %353 = vst.msk [vmem:[%s213 + $0x30] sm:$0xff] %vm227, %v342
      %354 = vst.msk [vmem:[%s213 + $0x38] sm:$0xff] %vm227, %v345
      %s355 = smul.u32 8, %s16
      %p356 = scmp.lt.s32.totalorder %s355, 15
      %s357 = scalar_select %p356, %s355, 15
      %s358 = smul.addr %s357, 8
      %s359 = scalar_lea.vmem %s3, %s358
      %s360 = smul.u32 8, %s16
      %p361 = scmp.lt.s32.totalorder %s360, 15
      %s362 = scalar_select %p361, %s360, 15
      %s363 = smul.addr %s362, 8
      %s364 = scalar_lea.vmem %s4, %s363
      // Predicated region
      $region33: #{tpu_custom_call.1} parent=31 // pred_check
        %p365 = pneg %p102
      $region34: #{tpu_custom_call.1} parent=31 // pred_check_branch
        %367 = sbr.rel (%p365) target = $region36
      $region35: #{tpu_custom_call.1} parent=31 // pred_region
        %s368 = smul.u32 8, %s16
      $region36: #{tpu_custom_call.1} parent=31 // pred_fallthru
        _
      // Predicated region
      $region37: #{tpu_custom_call.1} parent=31 // pred_check
        %p369 = pneg %p128
      $region38: #{tpu_custom_call.1} parent=31 // pred_check_branch
        %371 = sbr.rel (%p369) target = $region40
      $region39: #{tpu_custom_call.1} parent=31 // pred_region
        %s372 = smul.u32 8, %s16
      $region40: #{tpu_custom_call.1} parent=31 // pred_fallthru
        _
    $region32: #{tpu_custom_call.1} parent=5 // pred_fallthru
      _
    %p373 = scmp.le.s32.totalorder 2, %s11
    // Predicated region
    $region41: #{tpu_custom_call.1} parent=5 // pred_check
      %p374 = pneg %p373
    $region42: #{tpu_custom_call.1} parent=5 // pred_check_branch
      %376 = sbr.rel (%p374) target = $region44
    $region43: #{tpu_custom_call.1} parent=5 // pred_region
      %s377 = ssub.s32 %s11, 2
      // Predicated region
      $region45: #{tpu_custom_call.1} parent=43 // pred_check
        %p378 = pneg %p108
      $region46: #{tpu_custom_call.1} parent=43 // pred_check_branch
        %380 = sbr.rel (%p378) target = $region48
      $region47: #{tpu_custom_call.1} parent=43 // pred_region
        %s381 = smul.u32 8, %s17
        %p382 = scmp.lt.s32.totalorder %s381, 15
        %s383 = scalar_select %p382, %s381, 15
        %s384 = smul.addr %s383, 8
        %s385 = scalar_lea.vmem %s3, %s384
      $region48: #{tpu_custom_call.1} parent=43 // pred_fallthru
        _
      // Predicated region
      $region49: #{tpu_custom_call.1} parent=43 // pred_check
        %p386 = pneg %p134
      $region50: #{tpu_custom_call.1} parent=43 // pred_check_branch
        %388 = sbr.rel (%p386) target = $region52
      $region51: #{tpu_custom_call.1} parent=43 // pred_region
        %s389 = smul.u32 8, %s17
        %p390 = scmp.lt.s32.totalorder %s389, 15
        %s391 = scalar_select %p390, %s389, 15
        %s392 = smul.addr %s391, 8
        %s393 = scalar_lea.vmem %s4, %s392
      $region52: #{tpu_custom_call.1} parent=43 // pred_fallthru
        _
    $region44: #{tpu_custom_call.1} parent=5 // pred_fallthru
      _
  $region6: #{tpu_custom_call.1} parent=0 // loop_footer
    %s15 = sadd.s32 1, %s11
  $region7: #{tpu_custom_call.1} parent=0 // loop_footer_branch
    %10 = sbr.rel target = $region3
  $region8: #{tpu_custom_call.1} parent=0 // loop_exit
    _

</llo_original>
